<compile_context>
chip_gen: v5e
topology: v5e:2x2
jax: 0.10.0
libtpu: 0.0.40
codegen_flags: <defaults>
</compile_context>

<pallas_src>
import jax
import jax.numpy as jnp
from jax.experimental import pallas as pl
from jax.experimental.pallas import tpu as pltpu


def xor_mlp_kernel(params_ref, x_ref, o_ref):
    # params_ref : SMEM f32[9] = [w1_00, w1_01, w1_10, w1_11, b1_0, b1_1,
    #                             w2_0,  w2_1,  b2]
    # x_ref      : VMEM (2, tr, C)  -- feature-major, sublane/lane dense
    # o_ref      : VMEM (tr, C)     -- dense output slab
    x0 = x_ref[0]                      # (tr, C)
    x1 = x_ref[1]                      # (tr, C)

    w1_00 = params_ref[0]
    w1_01 = params_ref[1]
    w1_10 = params_ref[2]
    w1_11 = params_ref[3]
    b1_0 = params_ref[4]
    b1_1 = params_ref[5]
    w2_0 = params_ref[6]
    w2_1 = params_ref[7]
    b2 = params_ref[8]

    # Layer 1 + ReLU: plain VPU FMA chains (contraction dim is only 2 -> no MXU).
    h0 = jnp.maximum(w1_00 * x0 + w1_01 * x1 + b1_0, 0.0)
    h1 = jnp.maximum(w1_10 * x0 + w1_11 * x1 + b1_1, 0.0)

    # Layer 2 + sigmoid.  sigmoid(z) = 1 / (1 + exp(-z)); both exp and the
    # approximate reciprocal run on the EUP slot, keeping the VPU free.
    z = w2_0 * h0 + w2_1 * h1 + b2
    o_ref[...] = pl.reciprocal(1.0 + jnp.exp(-z), approx=True).astype(o_ref.dtype)


def _pick_layout(B, rows_per_tile=None):
    """Choose lane width C, row count R, rows-per-step tr and n_tiles.

    Zero-copy when B == R * C (the (2,B) -> (2,R,C) reshape is a free view);
    otherwise the wrapper pads the buffer once (rare fallback).
    """
    # Lane width: multiple of 128 (lane-dense, unmasked stores); prefer one
    # that divides B so no padding is needed.
    for C in (512, 256, 128):
        if B % C == 0:
            break
    else:
        C = 128
    R = -(-B // C)                                     # ceil(B / C) rows

    if rows_per_tile is not None:                      # explicit override (tests / tuning)
        if rows_per_tile >= R:
            return C, R, R, 1
        tr = max(8, (int(rows_per_tile) // 8) * 8)     # keep the (8,128) block rule
        R = -(-R // tr) * tr
        return C, R, tr, R // tr

    # ~1 MiB of HBM traffic per grid step (12 B/sample) amortizes the ~0.35 us
    # fixed per-step cost; >= 2 steps once there is >= 2 MiB of total work so
    # both v7x TensorCores get a tile.
    step_bytes = 1 << 20
    n = max(1, min(R // 8, (R * C * 12) // step_bytes))
    if n == 1:
        return C, R, R, 1                              # single step (tr == full dim)

    if R % 8:
        R = ((R + 7) // 8) * 8                         # a few pad rows so tiles align
    tr0 = max(8, ((-(-R // n)) + 7) // 8 * 8)
    tr = tr0
    while R % tr:                                      # prefer tr that divides R (zero-copy)
        tr -= 8
    if tr * 2 < tr0:                                   # degenerate divisor -> pad instead
        tr = tr0
        R = -(-R // tr) * tr
    return C, R, tr, R // tr


def xor_forward_fm(x_fm, w1, b1, w2, b2, *, rows_per_tile=None):
    """XORModel forward on feature-major input.

    x_fm : f32 (2, B)  (row 0 = feature 0, row 1 = feature 1)
    returns f32 (B,) of probabilities.
    """
    assert x_fm.ndim == 2 and x_fm.shape[0] == 2, x_fm.shape
    B = x_fm.shape[1]

    # Pack all 9 parameters into one flat SMEM vector (PyTorch (out, in) order).
    params = jnp.concatenate(
        [w1.reshape(-1), b1.reshape(-1), w2.reshape(-1), b2.reshape(-1)]
    ).astype(jnp.float32)

    C, R, tr, n_tiles = _pick_layout(B, rows_per_tile)
    B_pad = R * C

    x_fm = x_fm.astype(jnp.float32)
    if B_pad != B:
        # Fallback only: misaligned batch -> one padding copy.  Keep B a
        # multiple of 128 upstream to stay on the zero-copy path.
        # TODO(synk): a ragged last tile could instead be masked in-kernel
        # (B as an SMEM scalar + @pl.when), avoiding this copy entirely.
        x_fm = jnp.pad(x_fm, ((0, 0), (0, B_pad - B)))
    x3 = x_fm.reshape(2, R, C)                         # free view on the fast path

    # VMEM budget: double-buffered (2,tr,C) input + (tr,C) output f32 blocks.
    block_bytes = 4 * 3 * tr * C
    vmem_limit = int(min(48 << 20, max(16 << 20, 4 * block_bytes)))

    out = pl.pallas_call(
        xor_mlp_kernel,
        out_shape=jax.ShapeDtypeStruct((R, C), jnp.float32),
        grid=(n_tiles,),
        in_specs=[
            # Whole parameter vector in SMEM: no per-step DMA, no buffers.
            pl.BlockSpec(memory_space=pltpu.MemorySpace.SMEM),
            # x tile: both feature planes, tr sublane-rows x C lanes per step.
            pl.BlockSpec((2, tr, C), lambda i: (0, i, 0)),
        ],
        # Sublane+lane dense output slab: full-vreg unmasked stores.
        out_specs=pl.BlockSpec((tr, C), lambda i: (i, 0)),
        compiler_params=pltpu.CompilerParams(
            dimension_semantics=("parallel",),         # v7x: shard tiles over 2 TCs
            vmem_limit_bytes=vmem_limit,
        ),
        cost_estimate=pl.CostEstimate(
            flops=9 * B_pad,
            transcendentals=2 * B_pad,
            bytes_accessed=12 * B_pad + 4 * int(params.size),
        ),
    )(params, x3)

    y = out.reshape(B_pad)
    return y if B_pad == B else y[:B]


def xor_forward(x, w1, b1, w2, b2, *, rows_per_tile=None):
    """PyTorch-facing adapter: x (B, 2) f32 -> (B, 1) f32.

    The transpose to feature-major is the only extra HBM pass; keep activations
    feature-major upstream (xor_forward_fm) to avoid it on large batches.
    """
    y = xor_forward_fm(x.astype(jnp.float32).T, w1, b1, w2, b2,
                       rows_per_tile=rows_per_tile)
    return y.reshape(-1, 1)


def init_params(key):
    # Matches nn.Linear shapes: layer1.weight (2,2), layer1.bias (2,),
    # layer2.weight (1,2), layer2.bias (1,).  U(-1/sqrt(fan_in), 1/sqrt(fan_in)).
    k1, k2, k3, k4 = jax.random.split(key, 4)
    bound = 1.0 / jnp.sqrt(2.0)
    w1 = jax.random.uniform(k1, (2, 2), jnp.float32, -bound, bound)
    b1 = jax.random.uniform(k2, (2,), jnp.float32, -bound, bound)
    w2 = jax.random.uniform(k3, (1, 2), jnp.float32, -bound, bound)
    b2 = jax.random.uniform(k4, (1,), jnp.float32, -bound, bound)
    return w1, b1, w2, b2


def _reference(x, w1, b1, w2, b2):
    h = jnp.maximum(x @ w1.T + b1[None, :], 0.0)
    return jax.nn.sigmoid(h @ w2.T + b2[None, :])


if __name__ == "__main__":
    key = jax.random.PRNGKey(0)
    kp, kx = jax.random.split(key)
    w1, b1, w2, b2 = init_params(kp)

    # Feature-major batch (no wrapper-side transpose needed): (2, B), B = 8192.
    B = 8192
    x_fm = jax.random.uniform(kx, (2, B), jnp.float32)
    ref = _reference(x_fm.T, w1, b1, w2, b2)[:, 0]

    # Default layout: single large grid step over the whole batch.
    y1 = jax.block_until_ready(xor_forward_fm(x_fm, w1, b1, w2, b2))
    # Forced 2-step grid (rows_per_tile=8) exercises the tiled / parallel path.
    y2 = jax.block_until_ready(xor_forward_fm(x_fm, w1, b1, w2, b2, rows_per_tile=8))

    # atol accounts for the EUP approximate reciprocal in the sigmoid.
    assert y1.shape == (B,) and y2.shape == (B,), (y1.shape, y2.shape)
    assert jnp.allclose(y1, ref, atol=5e-3), float(jnp.max(jnp.abs(y1 - ref)))
    assert jnp.allclose(y2, ref, atol=5e-3), float(jnp.max(jnp.abs(y2 - ref)))
    assert jnp.allclose(y1, y2, atol=1e-6)

    # Tiny PyTorch-layout batch (the 4 classic XOR corners) through the adapter;
    # exercises the padding fallback (B=4 -> one (1,128) tile).
    corners = jnp.array(
        [[0.0, 0.0], [0.0, 1.0], [1.0, 0.0], [1.0, 1.0]], dtype=jnp.float32
    )
    out_small = jax.block_until_ready(xor_forward(corners, w1, b1, w2, b2))
    ref_small = _reference(corners, w1, b1, w2, b2)
    assert out_small.shape == (4, 1), out_small.shape
    assert jnp.allclose(out_small, ref_small, atol=5e-3), (out_small, ref_small)

    print("KERNEL_OK")
</pallas_src>

<mosaic_0001>
module attributes {stable_mosaic.version = 11 : i64} {
  func.func @xor_mlp_kernel(%arg0: i32, %arg1: memref<9xf32, #tpu.memory_space<smem>>, %arg2: memref<2x16x512xf32, #tpu.memory_space<vmem>>, %arg3: memref<16x512xf32, #tpu.memory_space<vmem>>) attributes {dimension_semantics = [#tpu.dimension_semantics<parallel>], iteration_bounds = array<i64: 1>, scalar_prefetch = 0 : i64, scratch_operands = 0 : i64, tpu.core_type = #tpu.core_type<tc>, window_params = [{transform_indices = @transform_0, window_bounds = array<i64: 9>}, {transform_indices = @transform_1, window_bounds = array<i64: 2, 16, 512>}, {transform_indices = @transform_2, window_bounds = array<i64: 16, 512>}]} {
    %c0 = arith.constant 0 : index
    %c0_0 = arith.constant 0 : index
    %c0_1 = arith.constant 0 : index
    %0 = vector.load %arg2[%c0, %c0_0, %c0_1] : memref<2x16x512xf32, #tpu.memory_space<vmem>>, vector<1x16x512xf32>
    %1 = vector.shape_cast %0 : vector<1x16x512xf32> to vector<16x512xf32>
    %c1 = arith.constant 1 : index
    %c0_2 = arith.constant 0 : index
    %c0_3 = arith.constant 0 : index
    %2 = vector.load %arg2[%c1, %c0_2, %c0_3] : memref<2x16x512xf32, #tpu.memory_space<vmem>>, vector<1x16x512xf32>
    %3 = vector.shape_cast %2 : vector<1x16x512xf32> to vector<16x512xf32>
    %c0_4 = arith.constant 0 : index
    %4 = memref.load %arg1[%c0_4] : memref<9xf32, #tpu.memory_space<smem>>
    %c1_5 = arith.constant 1 : index
    %5 = memref.load %arg1[%c1_5] : memref<9xf32, #tpu.memory_space<smem>>
    %c2 = arith.constant 2 : index
    %6 = memref.load %arg1[%c2] : memref<9xf32, #tpu.memory_space<smem>>
    %c3 = arith.constant 3 : index
    %7 = memref.load %arg1[%c3] : memref<9xf32, #tpu.memory_space<smem>>
    %c4 = arith.constant 4 : index
    %8 = memref.load %arg1[%c4] : memref<9xf32, #tpu.memory_space<smem>>
    %c5 = arith.constant 5 : index
    %9 = memref.load %arg1[%c5] : memref<9xf32, #tpu.memory_space<smem>>
    %c6 = arith.constant 6 : index
    %10 = memref.load %arg1[%c6] : memref<9xf32, #tpu.memory_space<smem>>
    %c7 = arith.constant 7 : index
    %11 = memref.load %arg1[%c7] : memref<9xf32, #tpu.memory_space<smem>>
    %c8 = arith.constant 8 : index
    %12 = memref.load %arg1[%c8] : memref<9xf32, #tpu.memory_space<smem>>
    %13 = vector.broadcast %4 : f32 to vector<16x512xf32>
    %14 = arith.mulf %13, %1 : vector<16x512xf32>
    %15 = vector.broadcast %5 : f32 to vector<16x512xf32>
    %16 = arith.mulf %15, %3 : vector<16x512xf32>
    %17 = arith.addf %14, %16 : vector<16x512xf32>
    %18 = vector.broadcast %8 : f32 to vector<16x512xf32>
    %19 = arith.addf %17, %18 : vector<16x512xf32>
    %cst = arith.constant 0.000000e+00 : f32
    %20 = vector.broadcast %cst : f32 to vector<16x512xf32>
    %21 = arith.maximumf %19, %20 : vector<16x512xf32>
    %22 = vector.broadcast %6 : f32 to vector<16x512xf32>
    %23 = arith.mulf %22, %1 : vector<16x512xf32>
    %24 = vector.broadcast %7 : f32 to vector<16x512xf32>
    %25 = arith.mulf %24, %3 : vector<16x512xf32>
    %26 = arith.addf %23, %25 : vector<16x512xf32>
    %27 = vector.broadcast %9 : f32 to vector<16x512xf32>
    %28 = arith.addf %26, %27 : vector<16x512xf32>
    %cst_6 = arith.constant 0.000000e+00 : f32
    %29 = vector.broadcast %cst_6 : f32 to vector<16x512xf32>
    %30 = arith.maximumf %28, %29 : vector<16x512xf32>
    %31 = vector.broadcast %10 : f32 to vector<16x512xf32>
    %32 = arith.mulf %31, %21 : vector<16x512xf32>
    %33 = vector.broadcast %11 : f32 to vector<16x512xf32>
    %34 = arith.mulf %33, %30 : vector<16x512xf32>
    %35 = arith.addf %32, %34 : vector<16x512xf32>
    %36 = vector.broadcast %12 : f32 to vector<16x512xf32>
    %37 = arith.addf %35, %36 : vector<16x512xf32>
    %cst_7 = arith.constant 0.000000e+00 : f32
    %38 = vector.broadcast %cst_7 : f32 to vector<16x512xf32>
    %39 = arith.subf %38, %37 : vector<16x512xf32>
    %40 = math.exp %39 : vector<16x512xf32>
    %cst_8 = arith.constant 1.000000e+00 : f32
    %41 = vector.broadcast %cst_8 : f32 to vector<16x512xf32>
    %42 = arith.addf %41, %40 : vector<16x512xf32>
    %43 = tpu.reciprocal %42 {approx = true} : vector<16x512xf32> -> vector<16x512xf32>
    %c0_9 = arith.constant 0 : index
    %c0_10 = arith.constant 0 : index
    %44 = vector.load %arg3[%c0_9, %c0_10] : memref<16x512xf32, #tpu.memory_space<vmem>>, vector<16x512xf32>
    tpu.vector_store %arg3[%c0_9, %c0_10], %43 {strides = array<i32>} : memref<16x512xf32, #tpu.memory_space<vmem>>, vector<16x512xf32>,
    return
  }
  func.func @transform_0(%arg0: i32) -> i32 {
    %c0_i32 = arith.constant 0 : i32
    %c0_i32_0 = arith.constant 0 : i32
    return %c0_i32 : i32
  }
  func.func @transform_1(%arg0: i32) -> (i32, i32, i32) {
    %c0_i32 = arith.constant 0 : i32
    %c0_i32_0 = arith.constant 0 : i32
    %c0_i32_1 = arith.constant 0 : i32
    return %c0_i32, %arg0, %c0_i32_0 : i32, i32, i32
  }
  func.func @transform_2(%arg0: i32) -> (i32, i32) {
    %c0_i32 = arith.constant 0 : i32
    %c0_i32_0 = arith.constant 0 : i32
    return %arg0, %c0_i32 : i32, i32
  }
}

</mosaic_0001>

<llo_original>
// kernel: tpu_custom_call.1
$region0: #{tpu_custom_call.1}
  #allocation0 [shape = 'u32[]', space=smem, size = 0x4, offset = 0x4, fixed_abs, tag = 'smem constant byte address 0x4 - core index']
  #allocation1 [shape = 'u32[72,128]{1,0:T(1,128)}', space=vmem, size = 0x9000, scoped, tag = 'internal scratch']
  %s0 = inlined_call_operand.hbm [shape: f32[9], index: 0, kind: input, shape index: {}]
  %s1 = inlined_call_operand.hbm [shape: f32[2,16,512], index: 1, kind: input, shape index: {}]
  %s2 = inlined_call_operand.hbm [shape: f32[16,512], index: 2, kind: output, shape index: {}]
  %s3 = sld [smem:[#allocation0]]
  $region26: #{tpu_custom_call.1} parent=0
    _
  %s5 = ssub.s32 1, %s3
  %s6 = scalar_select 0, %s5, %s3
  $region1: #{tpu_custom_call.1} parent=0
    #allocation2 [shape = 'u8[512]{0}', space=smem, size = 0x200, scoped, tag = 'input window, operand 0, single buffered']
    #allocation3 [shape = 's32[1]{0}', space=sflag, size = 0x4, scoped, tag = 'scoped memory for tpu_custom_call.1']
    #allocation4 [shape = 's32[1]{0}', space=sflag, size = 0x4, scoped, tag = 'scoped memory for tpu_custom_call.1']
    #allocation5 [shape = 's32[1]{0}', space=sflag, size = 0x4, scoped, tag = 'scoped memory for tpu_custom_call.1']
    #allocation6 [shape = 'u8[65536]{0}', space=vmem, size = 0x10000, scoped, tag = 'input window, operand 1, single buffered']
    #allocation7 [shape = 'u8[32768]{0}', space=vmem, size = 0x8000, scoped, tag = 'output window, operand 0, single buffered']
    %7 = vsyncpa [#allocation5], 0
    %8 = vsyncpa [#allocation3], 0
    %9 = vsyncpa [#allocation4], 0
    // Predicated region
    $region2: #{tpu_custom_call.1} parent=1 // pred_check
      _
    $region3: #{tpu_custom_call.1} parent=1 // pred_check_branch
      %11 = sbr.rel (0) target = $region5
    $region4: #{tpu_custom_call.1} parent=1 // pred_region
      %13 = vsyncadd [#allocation5], 0
      %s15 = sshll.u32 %s0, 4
      %s16 = int_to_ptr.hbm [resolvable:$true] %s15
      %18 = dma.hbm_to_smem %s16, 16, [#allocation2], [#allocation5]
    $region5: #{tpu_custom_call.1} parent=1 // pred_fallthru
      _
    // Predicated region
    $region6: #{tpu_custom_call.1} parent=1 // pred_check
      _
    $region7: #{tpu_custom_call.1} parent=1 // pred_check_branch
      %20 = sbr.rel (0) target = $region9
    $region8: #{tpu_custom_call.1} parent=1 // pred_region
      %22 = vsyncadd [#allocation3], 0
      %s23 = sshll.u32 %s1, 4
      %s24 = int_to_ptr.hbm [resolvable:$true] %s23
      %s25 = sshll.u32 [#allocation6], 4
      %s26 = int_to_ptr.vmem [resolvable:$true] %s25
      %31 = dma.hbm_to_vmem [thread:$0]  %s24, 2048, %s26, [#allocation3], 512, 512, 32
    $region9: #{tpu_custom_call.1} parent=1 // pred_fallthru
      _
    // Predicated region
    $region10: #{tpu_custom_call.1} parent=1 // pred_check
      _
    $region11: #{tpu_custom_call.1} parent=1 // pred_check_branch
      %33 = sbr.rel (0) target = $region13
    $region12: #{tpu_custom_call.1} parent=1 // pred_region
      %35 = dma.done [#allocation5], 16
    $region13: #{tpu_custom_call.1} parent=1 // pred_fallthru
      _
    // Predicated region
    $region14: #{tpu_custom_call.1} parent=1 // pred_check
      _
    $region15: #{tpu_custom_call.1} parent=1 // pred_check_branch
      %37 = sbr.rel (0) target = $region17
    $region16: #{tpu_custom_call.1} parent=1 // pred_region
      %39 = dma.done [#allocation3], 2048
    $region17: #{tpu_custom_call.1} parent=1 // pred_fallthru
      _
    %40 = sfence
    %v41 = vld [vmem:[#allocation6] sm:$0xff]
    %v42 = vld [vmem:[#allocation6 + $0x8] sm:$0xff]
    %v43 = vld [vmem:[#allocation6 + $0x10] sm:$0xff]
    %v44 = vld [vmem:[#allocation6 + $0x18] sm:$0xff]
    %v45 = vld [vmem:[#allocation6 + $0x20] sm:$0xff]
    %v46 = vld [vmem:[#allocation6 + $0x28] sm:$0xff]
    %v47 = vld [vmem:[#allocation6 + $0x30] sm:$0xff]
    %v48 = vld [vmem:[#allocation6 + $0x38] sm:$0xff]
    %s49 = scalar_lea.vmem [#allocation6], 64
    %v50 = vld [vmem:[%s49] sm:$0xff]
    %v51 = vld [vmem:[%s49 + $0x8] sm:$0xff]
    %v52 = vld [vmem:[%s49 + $0x10] sm:$0xff]
    %v53 = vld [vmem:[%s49 + $0x18] sm:$0xff]
    %v54 = vld [vmem:[%s49 + $0x20] sm:$0xff]
    %v55 = vld [vmem:[%s49 + $0x28] sm:$0xff]
    %v56 = vld [vmem:[%s49 + $0x30] sm:$0xff]
    %v57 = vld [vmem:[%s49 + $0x38] sm:$0xff]
    %s58 = sld [smem:[#allocation2]]
    %s59 = sld [smem:[#allocation2 + $0x1]]
    %s60 = sld [smem:[#allocation2 + $0x2]]
    %s61 = sld [smem:[#allocation2 + $0x3]]
    %s62 = sld [smem:[#allocation2 + $0x4]]
    %s63 = sld [smem:[#allocation2 + $0x5]]
    %s64 = sld [smem:[#allocation2 + $0x6]]
    %s65 = sld [smem:[#allocation2 + $0x7]]
    %s66 = sld [smem:[#allocation2 + $0x8]]
    %v67 = vstv %s58
    %v68 = vmul.f32 %v67, %v41
    %v69 = vmul.f32 %v67, %v42
    %v70 = vmul.f32 %v67, %v43
    %v71 = vmul.f32 %v67, %v44
    %v72 = vmul.f32 %v67, %v45
    %v73 = vmul.f32 %v67, %v46
    %v74 = vmul.f32 %v67, %v47
    %v75 = vmul.f32 %v67, %v48
    %v76 = vstv %s59
    %v77 = vmul.f32 %v76, %v50
    %v78 = vmul.f32 %v76, %v51
    %v79 = vmul.f32 %v76, %v52
    %v80 = vmul.f32 %v76, %v53
    %v81 = vmul.f32 %v76, %v54
    %v82 = vmul.f32 %v76, %v55
    %v83 = vmul.f32 %v76, %v56
    %v84 = vmul.f32 %v76, %v57
    %v85 = vadd.f32 %v68, %v77
    %v86 = vadd.f32 %v69, %v78
    %v87 = vadd.f32 %v70, %v79
    %v88 = vadd.f32 %v71, %v80
    %v89 = vadd.f32 %v72, %v81
    %v90 = vadd.f32 %v73, %v82
    %v91 = vadd.f32 %v74, %v83
    %v92 = vadd.f32 %v75, %v84
    %v93 = vstv %s62
    %v94 = vadd.f32 %v85, %v93
    %v95 = vadd.f32 %v86, %v93
    %v96 = vadd.f32 %v87, %v93
    %v97 = vadd.f32 %v88, %v93
    %v98 = vadd.f32 %v89, %v93
    %v99 = vadd.f32 %v90, %v93
    %v100 = vadd.f32 %v91, %v93
    %v101 = vadd.f32 %v92, %v93
    %v102 = vmax.f32 %v94, 0.0
    %v103 = vmax.f32 %v95, 0.0
    %v104 = vmax.f32 %v96, 0.0
    %v105 = vmax.f32 %v97, 0.0
    %v106 = vmax.f32 %v98, 0.0
    %v107 = vmax.f32 %v99, 0.0
    %v108 = vmax.f32 %v100, 0.0
    %v109 = vmax.f32 %v101, 0.0
    %v110 = vstv %s60
    %v111 = vmul.f32 %v110, %v41
    %v112 = vmul.f32 %v110, %v42
    %v113 = vmul.f32 %v110, %v43
    %v114 = vmul.f32 %v110, %v44
    %v115 = vmul.f32 %v110, %v45
    %v116 = vmul.f32 %v110, %v46
    %v117 = vmul.f32 %v110, %v47
    %v118 = vmul.f32 %v110, %v48
    %v119 = vstv %s61
    %v120 = vmul.f32 %v119, %v50
    %v121 = vmul.f32 %v119, %v51
    %v122 = vmul.f32 %v119, %v52
    %v123 = vmul.f32 %v119, %v53
    %v124 = vmul.f32 %v119, %v54
    %v125 = vmul.f32 %v119, %v55
    %v126 = vmul.f32 %v119, %v56
    %v127 = vmul.f32 %v119, %v57
    %v128 = vadd.f32 %v111, %v120
    %v129 = vadd.f32 %v112, %v121
    %v130 = vadd.f32 %v113, %v122
    %v131 = vadd.f32 %v114, %v123
    %v132 = vadd.f32 %v115, %v124
    %v133 = vadd.f32 %v116, %v125
    %v134 = vadd.f32 %v117, %v126
    %v135 = vadd.f32 %v118, %v127
    %v136 = vstv %s63
    %v137 = vadd.f32 %v128, %v136
    %v138 = vadd.f32 %v129, %v136
    %v139 = vadd.f32 %v130, %v136
    %v140 = vadd.f32 %v131, %v136
    %v141 = vadd.f32 %v132, %v136
    %v142 = vadd.f32 %v133, %v136
    %v143 = vadd.f32 %v134, %v136
    %v144 = vadd.f32 %v135, %v136
    %v145 = vmax.f32 %v137, 0.0
    %v146 = vmax.f32 %v138, 0.0
    %v147 = vmax.f32 %v139, 0.0
    %v148 = vmax.f32 %v140, 0.0
    %v149 = vmax.f32 %v141, 0.0
    %v150 = vmax.f32 %v142, 0.0
    %v151 = vmax.f32 %v143, 0.0
    %v152 = vmax.f32 %v144, 0.0
    %v153 = vstv %s64
    %v154 = vmul.f32 %v153, %v102
    %v155 = vmul.f32 %v153, %v103
    %v156 = vmul.f32 %v153, %v104
    %v157 = vmul.f32 %v153, %v105
    %v158 = vmul.f32 %v153, %v106
    %v159 = vmul.f32 %v153, %v107
    %v160 = vmul.f32 %v153, %v108
    %v161 = vmul.f32 %v153, %v109
    %v162 = vstv %s65
    %v163 = vmul.f32 %v162, %v145
    %v164 = vmul.f32 %v162, %v146
    %v165 = vmul.f32 %v162, %v147
    %v166 = vmul.f32 %v162, %v148
    %v167 = vmul.f32 %v162, %v149
    %v168 = vmul.f32 %v162, %v150
    %v169 = vmul.f32 %v162, %v151
    %v170 = vmul.f32 %v162, %v152
    %v171 = vadd.f32 %v154, %v163
    %v172 = vadd.f32 %v155, %v164
    %v173 = vadd.f32 %v156, %v165
    %v174 = vadd.f32 %v157, %v166
    %v175 = vadd.f32 %v158, %v167
    %v176 = vadd.f32 %v159, %v168
    %v177 = vadd.f32 %v160, %v169
    %v178 = vadd.f32 %v161, %v170
    %v179 = vstv %s66
    %v180 = vadd.f32 %v171, %v179
    %v181 = vadd.f32 %v172, %v179
    %v182 = vadd.f32 %v173, %v179
    %v183 = vadd.f32 %v174, %v179
    %v184 = vadd.f32 %v175, %v179
    %v185 = vadd.f32 %v176, %v179
    %v186 = vadd.f32 %v177, %v179
    %v187 = vadd.f32 %v178, %v179
    %v188 = vsub.f32 0.0, %v180
    %v189 = vsub.f32 0.0, %v181
    %v190 = vsub.f32 0.0, %v182
    %v191 = vsub.f32 0.0, %v183
    %v192 = vsub.f32 0.0, %v184
    %v193 = vsub.f32 0.0, %v185
    %v194 = vsub.f32 0.0, %v186
    %v195 = vsub.f32 0.0, %v187
    %v196 = vmul.f32 %v188, 1.442695
    %v197 = vpow.pop %v196
    %v198 = vmul.f32 %v189, 1.442695
    %v199 = vpow.pop %v198
    %v200 = vmul.f32 %v190, 1.442695
    %v201 = vpow.pop %v200
    %v202 = vmul.f32 %v191, 1.442695
    %v203 = vpow.pop %v202
    %v204 = vmul.f32 %v192, 1.442695
    %v205 = vpow.pop %v204
    %v206 = vmul.f32 %v193, 1.442695
    %v207 = vpow.pop %v206
    %v208 = vmul.f32 %v194, 1.442695
    %v209 = vpow.pop %v208
    %v210 = vmul.f32 %v195, 1.442695
    %v211 = vpow.pop %v210
    %v212 = vadd.f32 %v197, 1.0
    %v213 = vadd.f32 %v199, 1.0
    %v214 = vadd.f32 %v201, 1.0
    %v215 = vadd.f32 %v203, 1.0
    %v216 = vadd.f32 %v205, 1.0
    %v217 = vadd.f32 %v207, 1.0
    %v218 = vadd.f32 %v209, 1.0
    %v219 = vadd.f32 %v211, 1.0
    %v220 = vrcp.pop %v212
    %v221 = vrcp.pop %v213
    %v222 = vrcp.pop %v214
    %v223 = vrcp.pop %v215
    %v224 = vrcp.pop %v216
    %v225 = vrcp.pop %v217
    %v226 = vrcp.pop %v218
    %v227 = vrcp.pop %v219
    %228 = vst [vmem:[#allocation7] sm:$0xff] %v220
    %229 = vst [vmem:[#allocation7 + $0x8] sm:$0xff] %v221
    %230 = vst [vmem:[#allocation7 + $0x10] sm:$0xff] %v222
    %231 = vst [vmem:[#allocation7 + $0x18] sm:$0xff] %v223
    %232 = vst [vmem:[#allocation7 + $0x20] sm:$0xff] %v224
    %233 = vst [vmem:[#allocation7 + $0x28] sm:$0xff] %v225
    %234 = vst [vmem:[#allocation7 + $0x30] sm:$0xff] %v226
    %235 = vst [vmem:[#allocation7 + $0x38] sm:$0xff] %v227
    // Predicated region
    $region18: #{tpu_custom_call.1} parent=1 // pred_check
      _
    $region19: #{tpu_custom_call.1} parent=1 // pred_check_branch
      %237 = sbr.rel (0) target = $region21
    $region20: #{tpu_custom_call.1} parent=1 // pred_region
      %239 = vsyncadd [#allocation4], 0
      %s240 = sshll.u32 [#allocation7], 4
      %s241 = int_to_ptr.vmem [resolvable:$true] %s240
      %s242 = sshll.u32 %s2, 4
      %s243 = int_to_ptr.hbm [resolvable:$true] %s242
      %248 = dma.vmem_to_hbm [thread:$0]  %s241, 1024, %s243, [#allocation4], 512, 512, 32
    $region21: #{tpu_custom_call.1} parent=1 // pred_fallthru
      _
    // Predicated region
    $region22: #{tpu_custom_call.1} parent=1 // pred_check
      _
    $region23: #{tpu_custom_call.1} parent=1 // pred_check_branch
      %250 = sbr.rel (0) target = $region25
    $region24: #{tpu_custom_call.1} parent=1 // pred_region
      %252 = dma.done [#allocation4], 1024
    $region25: #{tpu_custom_call.1} parent=1 // pred_fallthru
      _
    %253 = vsyncpa [#allocation3], 1
    %254 = vsyncpa [#allocation4], 1
    %255 = vsyncpa [#allocation5], 1

</llo_original>
